<compile_context>
chip_gen: v5e
topology: v5e:2x2
jax: 0.10.0
libtpu: 0.0.40
codegen_flags: <defaults>
</compile_context>

<pallas_src>
import functools

import jax
import jax.numpy as jnp
from jax.experimental import pallas as pl
from jax.experimental.pallas import tpu as pltpu

BF16 = jnp.bfloat16
NEG_INF = -1e9


# ----------------------------------------------------------------------------
# Shared math helpers (identical code used in kernels and in the JAX reference).
# ----------------------------------------------------------------------------
def _layer_norm(x, gamma, beta, eps=1e-5):
    mean = jnp.mean(x, axis=-1, keepdims=True)
    c = x - mean
    var = jnp.mean(c * c, axis=-1, keepdims=True)
    return c * jax.lax.rsqrt(var + eps) * gamma + beta


def _gelu_tanh(x):
    # TODO(synk): HF BART's ACT2FN["gelu"] is the exact erf GELU; the tanh
    # approximation is used here (erf is not reliably lowerable in Mosaic).
    return 0.5 * x * (1.0 + jnp.tanh(0.7978845608028654 * (x + 0.044715 * x * x * x)))


def _pick_tile(n, ladder=(512, 256, 128, 64, 32, 16, 8)):
    for t in ladder:
        if t <= n and n % t == 0:
            return t
    return n


def _cp(sem, est_bytes):
    """CompilerParams with an explicit VMEM budget (safe on v5e/v6e/v7x)."""
    limit = int(min(max(2 * est_bytes + (4 << 20), 32 << 20), 64 << 20))
    return pltpu.CompilerParams(dimension_semantics=sem, vmem_limit_bytes=limit)


def _padding_to_additive(pad_mask_bool, batch, length):
    """Compact additive key-padding mask (B, 1, L): 0 keep / -1e9 pad."""
    if pad_mask_bool is None:
        return jnp.zeros((batch, 1, length), jnp.float32)
    return jnp.where(pad_mask_bool, NEG_INF, 0.0).astype(jnp.float32).reshape(
        batch, 1, length)


# ----------------------------------------------------------------------------
# Kernel A: fused row projection  rows @ W_packed + b_packed, split outputs.
# ----------------------------------------------------------------------------
def _proj_split_kernel(x_ref, w_ref, b_ref, *out_refs, out_dims):
    x = x_ref[...].astype(BF16)                                   # (tb, C)
    y = jnp.dot(x, w_ref[...], preferred_element_type=jnp.float32) + b_ref[...]
    off = 0
    for o_ref, d in zip(out_refs, out_dims):
        o_ref[...] = y[:, off:off + d].astype(o_ref.dtype)
        off += d


def _fused_proj(rows, w, b, out_dims, row_tile=None):
    """rows: (N, C) f32; w: (C, sum(out_dims)) bf16; b: (1, sum(out_dims)) f32."""
    N, C = rows.shape
    P = w.shape[1]
    tb = row_tile if row_tile is not None else _pick_tile(N)
    assert N % tb == 0, "row tile must divide the number of rows"
    est = (w.size * 2 + b.size * 4                                 # resident weights
           + 2 * (tb * C * 4 + tb * P * 6))                        # dbl-buffered blocks
    kernel = functools.partial(_proj_split_kernel, out_dims=tuple(out_dims))
    outs = pl.pallas_call(
        kernel,
        out_shape=tuple(jax.ShapeDtypeStruct((N, d), BF16) for d in out_dims),
        grid_spec=pl.GridSpec(
            grid=(N // tb,),
            in_specs=[
                pl.BlockSpec((tb, C), lambda i: (i, 0)),           # activation rows
                pl.BlockSpec((C, P), lambda i: (0, 0)),            # packed W (resident)
                pl.BlockSpec((1, P), lambda i: (0, 0)),            # packed bias
            ],
            out_specs=tuple(pl.BlockSpec((tb, d), lambda i: (i, 0)) for d in out_dims),
        ),
        compiler_params=_cp(("parallel",), est),
    )(rows, w, b)
    return tuple(outs)


# ----------------------------------------------------------------------------
# Kernel B: fused attention residual block (all heads batched, q-tiled).
#   out = LayerNorm( x + (softmax(Q K^T + masks) V) @ Wo + bo )
# ----------------------------------------------------------------------------
def _attn_block_kernel(x_ref, q_ref, k_ref, v_ref, kpm_ref,
                       wo_ref, bo_ref, g_ref, beta_ref, o_ref,
                       *, num_heads, causal):
    tq, C = q_ref.shape[1], q_ref.shape[2]
    S = k_ref.shape[1]
    dh = C // num_heads

    x = x_ref[0].astype(jnp.float32)          # (tq, C) residual
    q = q_ref[0]                              # (tq, C) bf16, already scaled
    k = k_ref[0]                              # (S, C)  bf16
    v = v_ref[0]                              # (S, C)  bf16

    # Head-batched layout (H, len, dh): one batched dot_general over all heads.
    qh = jnp.transpose(q.reshape(tq, num_heads, dh), (1, 0, 2))
    kh = jnp.transpose(k.reshape(S, num_heads, dh), (1, 0, 2))
    vh = jnp.transpose(v.reshape(S, num_heads, dh), (1, 0, 2))

    scores = jnp.einsum("hqd,hkd->hqk", qh, kh,
                        preferred_element_type=jnp.float32)        # (H, tq, S) f32
    scores = scores + kpm_ref[0]                                   # (1, S) broadcast
    if causal:
        # causal mask generated in-kernel: no (B,T,S) mask in HBM.
        q0 = pl.program_id(1) * tq
        rows = jax.lax.broadcasted_iota(jnp.int32, (tq, S), 0) + q0
        cols = jax.lax.broadcasted_iota(jnp.int32, (tq, S), 1)
        scores = scores + jnp.where(cols > rows, NEG_INF, 0.0).astype(
            jnp.float32)[None, :, :]

    # softmax in f32; divide replaced by EUP approximate reciprocal.
    m = jnp.max(scores, axis=-1, keepdims=True)
    e = jnp.exp(scores - m)
    l = jnp.sum(e, axis=-1, keepdims=True)
    probs = (e * pl.reciprocal(l, approx=True)).astype(BF16)
    # TODO(synk): attention dropout is identity (inference mode).

    ctx = jnp.einsum("hqk,hkd->hqd", probs, vh,
                     preferred_element_type=jnp.float32)           # (H, tq, dh)
    ctx = jnp.transpose(ctx, (1, 0, 2)).reshape(tq, C)             # (tq, C)

    # ONE full-width out-projection (K = C), then residual + post-LayerNorm.
    y = jnp.dot(ctx.astype(BF16), wo_ref[...],
                preferred_element_type=jnp.float32) + bo_ref[...]
    o_ref[0] = _layer_norm(x + y, g_ref[...], beta_ref[...]).astype(o_ref.dtype)


def _attn_block(x, q, k, v, kpm, attn_p, ln_p, num_heads, causal, q_tile=None):
    """x: (B,T,C) f32 residual; q: (B,T,C) bf16; k,v: (B,S,C) bf16; kpm: (B,1,S)."""
    B, T, C = x.shape
    S = k.shape[1]
    tq = q_tile if q_tile is not None else _pick_tile(T)
    assert T % tq == 0, "q tile must divide T"
    est = (attn_p["wo"].size * 2 + 4 * C * 4                        # resident params
           + 2 * (tq * C * 4 + tq * C * 2 + 2 * S * C * 2 + S * 4 + tq * C * 4)
           + 2 * num_heads * tq * S * 4)                            # scores temporaries
    kernel = functools.partial(_attn_block_kernel, num_heads=num_heads, causal=causal)

    def resident(shape):
        return pl.BlockSpec(shape, lambda b, i: (0, 0))

    return pl.pallas_call(
        kernel,
        out_shape=jax.ShapeDtypeStruct((B, T, C), x.dtype),
        grid_spec=pl.GridSpec(
            grid=(B, T // tq),
            in_specs=[
                pl.BlockSpec((1, tq, C), lambda b, i: (b, i, 0)),   # residual x tile
                pl.BlockSpec((1, tq, C), lambda b, i: (b, i, 0)),   # Q tile
                pl.BlockSpec((1, S, C), lambda b, i: (b, 0, 0)),    # K (full KV len)
                pl.BlockSpec((1, S, C), lambda b, i: (b, 0, 0)),    # V
                pl.BlockSpec((1, 1, S), lambda b, i: (b, 0, 0)),    # additive key pad
                resident((C, C)), resident((1, C)),                 # Wo, bo
                resident((1, C)), resident((1, C)),                 # LN gamma, beta
            ],
            out_specs=pl.BlockSpec((1, tq, C), lambda b, i: (b, i, 0)),
        ),
        compiler_params=_cp(("parallel", "parallel"), est),
    )(x, q, k, v, kpm, attn_p["wo"], attn_p["bo"], ln_p["gamma"], ln_p["beta"])
    # TODO(synk): for very long S, stream K/V tiles with an online softmax
    # (flash-style third grid axis) instead of holding the full (S, C) block.


# ----------------------------------------------------------------------------
# Kernel C: fused FFN residual block, row-tiled over (batch*seq).
#   out = LayerNorm( x + fc2( gelu( fc1(x) ) ) )
# ----------------------------------------------------------------------------
def _ffn_block_kernel(x_ref, w1_ref, b1_ref, w2_ref, b2_ref, g_ref, beta_ref, o_ref):
    x = x_ref[...].astype(jnp.float32)                              # (tb, C) residual
    h = jnp.dot(x.astype(BF16), w1_ref[...],
                preferred_element_type=jnp.float32) + b1_ref[...]
    h = _gelu_tanh(h)
    # TODO(synk): activation-dropout / dropout are identity (inference mode).
    y = jnp.dot(h.astype(BF16), w2_ref[...],
                preferred_element_type=jnp.float32) + b2_ref[...]
    o_ref[...] = _layer_norm(x + y, g_ref[...], beta_ref[...]).astype(o_ref.dtype)
    # TODO(synk): for BART-large FFN dims on v7x, tile the hidden dim F and
    # accumulate fc2 partial sums in an f32 scratch instead of a (tb, F) block.


def _ffn_block(rows, w1, b1, w2, b2, gamma, beta, row_tile=None):
    N, C = rows.shape
    F = w1.shape[1]
    tb = row_tile if row_tile is not None else _pick_tile(N)
    assert N % tb == 0, "row tile must divide the number of rows"
    est = ((w1.size + w2.size) * 2 + (F + 3 * C) * 4
           + 2 * (tb * C * 8) + tb * F * 6)

    def resident(shape):
        return pl.BlockSpec(shape, lambda i: (0, 0))

    return pl.pallas_call(
        _ffn_block_kernel,
        out_shape=jax.ShapeDtypeStruct((N, C), rows.dtype),
        grid_spec=pl.GridSpec(
            grid=(N // tb,),
            in_specs=[
                pl.BlockSpec((tb, C), lambda i: (i, 0)),            # x rows (tiled)
                resident((C, F)), resident((1, F)),                 # fc1
                resident((F, C)), resident((1, C)),                 # fc2
                resident((1, C)), resident((1, C)),                 # LN gamma, beta
            ],
            out_specs=pl.BlockSpec((tb, C), lambda i: (i, 0)),
        ),
        compiler_params=_cp(("parallel",), est),
    )(rows, w1, b1, w2, b2, gamma, beta)


# ----------------------------------------------------------------------------
# Parameter preparation: fuse/scale/cast weights once (outside the kernels).
# ----------------------------------------------------------------------------
def prepare_decoder_layer_params(raw, num_heads):
    """raw weights are (in, out) = PyTorch weight.T; biases (1, out); all f32."""
    C = raw["self_attn"]["wq"].shape[0]
    scaling = float((C // num_heads) ** -0.5)

    def attn_self(p):
        return {
            "w_qkv": jnp.concatenate([p["wq"] * scaling, p["wk"], p["wv"]],
                                     axis=1).astype(BF16),
            "b_qkv": jnp.concatenate([p["bq"] * scaling, p["bk"], p["bv"]],
                                     axis=1).astype(jnp.float32),
            "wo": p["wo"].astype(BF16), "bo": p["bo"].astype(jnp.float32),
        }

    def attn_cross(p):
        return {
            "w_q": (p["wq"] * scaling).astype(BF16),
            "b_q": (p["bq"] * scaling).astype(jnp.float32),
            "w_kv": jnp.concatenate([p["wk"], p["wv"]], axis=1).astype(BF16),
            "b_kv": jnp.concatenate([p["bk"], p["bv"]], axis=1).astype(jnp.float32),
            "wo": p["wo"].astype(BF16), "bo": p["bo"].astype(jnp.float32),
        }

    def ln(p):
        return {"gamma": p["gamma"].astype(jnp.float32),
                "beta": p["beta"].astype(jnp.float32)}

    return {
        "self_attn": attn_self(raw["self_attn"]), "self_attn_ln": ln(raw["self_attn_ln"]),
        "encoder_attn": attn_cross(raw["encoder_attn"]),
        "encoder_attn_ln": ln(raw["encoder_attn_ln"]),
        "fc1_w": raw["fc1_w"].astype(BF16), "fc1_b": raw["fc1_b"].astype(jnp.float32),
        "fc2_w": raw["fc2_w"].astype(BF16), "fc2_b": raw["fc2_b"].astype(jnp.float32),
        "final_ln": ln(raw["final_ln"]),
    }


# ----------------------------------------------------------------------------
# DecoderLayer forward (inference / post-norm).
# ----------------------------------------------------------------------------
def decoder_layer_forward_btc(x, enc, p, num_heads, decoder_padding_mask=None,
                              encoder_attn_mask=None, causal=True,
                              q_tile=None, row_tile=None):
    """x: (B, T, C) f32; enc: (B, S, C) f32."""
    B, T, C = x.shape
    S = enc.shape[1]
    self_kpm = _padding_to_additive(decoder_padding_mask, B, T)
    cross_kpm = _padding_to_additive(encoder_attn_mask, B, S)

    # 1) self-attention residual block (fused QKV projection, in-kernel causal mask)
    q, k, v = _fused_proj(x.reshape(B * T, C), p["self_attn"]["w_qkv"],
                          p["self_attn"]["b_qkv"], (C, C, C), row_tile)
    x = _attn_block(x, q.reshape(B, T, C), k.reshape(B, T, C), v.reshape(B, T, C),
                    self_kpm, p["self_attn"], p["self_attn_ln"], num_heads,
                    causal=causal, q_tile=q_tile)

    # 2) encoder-decoder cross-attention residual block (K/V computed once)
    # TODO(synk): layer_state incremental-decoding KV cache, output_attentions and
    # the normalize_before=True (pre-norm) branch are not implemented.
    (q,) = _fused_proj(x.reshape(B * T, C), p["encoder_attn"]["w_q"],
                       p["encoder_attn"]["b_q"], (C,), row_tile)
    k, v = _fused_proj(enc.reshape(B * S, C), p["encoder_attn"]["w_kv"],
                       p["encoder_attn"]["b_kv"], (C, C), row_tile)
    x = _attn_block(x, q.reshape(B, T, C), k.reshape(B, S, C), v.reshape(B, S, C),
                    cross_kpm, p["encoder_attn"], p["encoder_attn_ln"], num_heads,
                    causal=False, q_tile=q_tile)

    # 3) feed-forward residual block (row-tiled over batch*seq)
    rows = _ffn_block(x.reshape(B * T, C), p["fc1_w"], p["fc1_b"],
                      p["fc2_w"], p["fc2_b"],
                      p["final_ln"]["gamma"], p["final_ln"]["beta"], row_tile)
    return rows.reshape(B, T, C)


def decoder_layer_forward(x_tbc, encoder_hidden_states_sbc, p, num_heads, **kw):
    """PyTorch layout: x (T,B,C), encoder states (S,B,C).
    TODO(synk): keep the (B,T,C) layout across layers (decoder_layer_forward_btc)
    to avoid these two boundary transposes entirely."""
    x = jnp.transpose(x_tbc, (1, 0, 2))
    enc = jnp.transpose(encoder_hidden_states_sbc, (1, 0, 2))
    out = decoder_layer_forward_btc(x, enc, p, num_heads, **kw)
    return jnp.transpose(out, (1, 0, 2))


# ----------------------------------------------------------------------------
# Pure-JAX reference (mirrors the PyTorch module in eval mode with the same
# bf16-input / f32-accumulate mixed-precision policy as the kernels).
# ----------------------------------------------------------------------------
def _ref_decoder_layer(x_tbc, enc_sbc, p, num_heads,
                       decoder_padding_mask=None, encoder_attn_mask=None, causal=True):
    T, B, C = x_tbc.shape
    S = enc_sbc.shape[0]
    H = num_heads
    dh = C // H
    x = jnp.transpose(x_tbc, (1, 0, 2)).astype(jnp.float32)
    enc = jnp.transpose(enc_sbc, (1, 0, 2)).astype(jnp.float32)

    def proj(rows, w, b):
        return (jnp.dot(rows.astype(BF16), w, preferred_element_type=jnp.float32)
                + b).astype(BF16)

    def attn(q, k, v, kpm, wo, bo, is_causal):
        Tq, Sk = q.shape[1], k.shape[1]
        qh = q.reshape(B, Tq, H, dh).transpose(0, 2, 1, 3)
        kh = k.reshape(B, Sk, H, dh).transpose(0, 2, 1, 3)
        vh = v.reshape(B, Sk, H, dh).transpose(0, 2, 1, 3)
        s = jnp.einsum("bhqd,bhkd->bhqk", qh, kh, preferred_element_type=jnp.float32)
        s = s + kpm[:, None, :, :]
        if is_causal:
            ii = jnp.arange(Tq)[:, None]
            jj = jnp.arange(Sk)[None, :]
            s = s + jnp.where(jj > ii, NEG_INF, 0.0)[None, None]
        m = jnp.max(s, axis=-1, keepdims=True)
        e = jnp.exp(s - m)
        pr = (e / jnp.sum(e, axis=-1, keepdims=True)).astype(BF16)
        ctx = jnp.einsum("bhqk,bhkd->bhqd", pr, vh, preferred_element_type=jnp.float32)
        ctx = ctx.transpose(0, 2, 1, 3).reshape(B, Tq, C)
        return jnp.dot(ctx.astype(BF16), wo, preferred_element_type=jnp.float32) + bo

    self_kpm = _padding_to_additive(decoder_padding_mask, B, T)
    cross_kpm = _padding_to_additive(encoder_attn_mask, B, S)

    qkv = proj(x.reshape(B * T, C), p["self_attn"]["w_qkv"], p["self_attn"]["b_qkv"])
    q = qkv[:, :C].reshape(B, T, C)
    k = qkv[:, C:2 * C].reshape(B, T, C)
    v = qkv[:, 2 * C:].reshape(B, T, C)
    a = attn(q, k, v, self_kpm, p["self_attn"]["wo"], p["self_attn"]["bo"], causal)
    x = _layer_norm(x + a, p["self_attn_ln"]["gamma"], p["self_attn_ln"]["beta"])

    q = proj(x.reshape(B * T, C), p["encoder_attn"]["w_q"],
             p["encoder_attn"]["b_q"]).reshape(B, T, C)
    kv = proj(enc.reshape(B * S, C), p["encoder_attn"]["w_kv"], p["encoder_attn"]["b_kv"])
    k = kv[:, :C].reshape(B, S, C)
    v = kv[:, C:].reshape(B, S, C)
    a = attn(q, k, v, cross_kpm, p["encoder_attn"]["wo"], p["encoder_attn"]["bo"], False)
    x = _layer_norm(x + a, p["encoder_attn_ln"]["gamma"], p["encoder_attn_ln"]["beta"])

    rows = x.reshape(B * T, C)
    h = jnp.dot(rows.astype(BF16), p["fc1_w"],
                preferred_element_type=jnp.float32) + p["fc1_b"]
    h = _gelu_tanh(h)
    y = jnp.dot(h.astype(BF16), p["fc2_w"],
                preferred_element_type=jnp.float32) + p["fc2_b"]
    rows = _layer_norm(rows + y, p["final_ln"]["gamma"], p["final_ln"]["beta"])
    return jnp.transpose(rows.reshape(B, T, C), (1, 0, 2))


# ----------------------------------------------------------------------------
# Demo / self-check
# ----------------------------------------------------------------------------
if __name__ == "__main__":
    T, S, B = 8, 16, 2          # decoder len, encoder len, batch
    C, H, FFN = 256, 2, 512     # d_model, heads (head_dim=128), decoder_ffn_dim

    key = jax.random.PRNGKey(0)
    _keys = iter(jax.random.split(key, 64))

    def nk():
        return next(_keys)

    def linear(fan_in, fan_out):
        w = jax.random.normal(nk(), (fan_in, fan_out), jnp.float32) * (fan_in ** -0.5)
        b = 0.02 * jax.random.normal(nk(), (1, fan_out), jnp.float32)
        return w, b

    def attn_raw():
        wq, bq = linear(C, C)
        wk, bk = linear(C, C)
        wv, bv = linear(C, C)
        wo, bo = linear(C, C)
        return dict(wq=wq, bq=bq, wk=wk, bk=bk, wv=wv, bv=bv, wo=wo, bo=bo)

    def ln_raw():
        return dict(gamma=1.0 + 0.1 * jax.random.normal(nk(), (1, C), jnp.float32),
                    beta=0.05 * jax.random.normal(nk(), (1, C), jnp.float32))

    raw = {"self_attn": attn_raw(), "self_attn_ln": ln_raw(),
           "encoder_attn": attn_raw(), "encoder_attn_ln": ln_raw()}
    fc1_w, fc1_b = linear(C, FFN)
    fc2_w, fc2_b = linear(FFN, C)
    raw.update(fc1_w=fc1_w, fc1_b=fc1_b, fc2_w=fc2_w, fc2_b=fc2_b, final_ln=ln_raw())

    params = prepare_decoder_layer_params(raw, H)

    x = jax.random.normal(nk(), (T, B, C), jnp.float32)        # (T, B, C) PyTorch layout
    enc = jax.random.normal(nk(), (S, B, C), jnp.float32)      # (S, B, C)

    # encoder key-padding mask: last 3 encoder positions of batch 1 are padding
    enc_pad = jnp.zeros((B, S), jnp.bool_).at[1, S - 3:].set(True)

    out = decoder_layer_forward(
        x, enc, params, H,
        decoder_padding_mask=None, encoder_attn_mask=enc_pad, causal=True,
        q_tile=8, row_tile=8,   # small tiles -> multi-step grids at these toy shapes
    )
    out = jax.block_until_ready(out)

    ref = _ref_decoder_layer(x, enc, params, H, None, enc_pad, True)

    assert out.shape == (T, B, C)
    max_err = float(jnp.max(jnp.abs(out - ref)))
    assert max_err < 2e-2, f"max_err={max_err}"   # bf16 dots + approx reciprocal

    print("KERNEL_OK")
</pallas_src>

<mosaic_0001>
module attributes {stable_mosaic.version = 11 : i64} {
  func.func @_proj_split_kernel(%arg0: i32, %arg1: memref<8x256xf32, #tpu.memory_space<vmem>>, %arg2: memref<256x768xbf16, #tpu.memory_space<vmem>>, %arg3: memref<1x768xf32, #tpu.memory_space<vmem>>, %arg4: memref<8x256xbf16, #tpu.memory_space<vmem>>, %arg5: memref<8x256xbf16, #tpu.memory_space<vmem>>, %arg6: memref<8x256xbf16, #tpu.memory_space<vmem>>) attributes {dimension_semantics = [#tpu.dimension_semantics<parallel>], iteration_bounds = array<i64: 2>, scalar_prefetch = 0 : i64, scratch_operands = 0 : i64, tpu.core_type = #tpu.core_type<tc>, window_params = [{transform_indices = @transform_0, window_bounds = array<i64: 8, 256>}, {pipeline_mode = #tpu.pipeline_mode<synchronous>, transform_indices = @transform_1, window_bounds = array<i64: 256, 768>}, {pipeline_mode = #tpu.pipeline_mode<synchronous>, transform_indices = @transform_2, window_bounds = array<i64: 1, 768>}, {transform_indices = @transform_3, window_bounds = array<i64: 8, 256>}, {transform_indices = @transform_4, window_bounds = array<i64: 8, 256>}, {transform_indices = @transform_5, window_bounds = array<i64: 8, 256>}]} {
    %c0 = arith.constant 0 : index
    %c0_0 = arith.constant 0 : index
    %0 = vector.load %arg1[%c0, %c0_0] : memref<8x256xf32, #tpu.memory_space<vmem>>, vector<8x256xf32>
    %1 = arith.truncf %0 : vector<8x256xf32> to vector<8x256xbf16>
    %c0_1 = arith.constant 0 : index
    %c0_2 = arith.constant 0 : index
    %2 = vector.load %arg2[%c0_1, %c0_2] : memref<256x768xbf16, #tpu.memory_space<vmem>>, vector<256x768xbf16>
    %cst = arith.constant dense<0.000000e+00> : vector<8x768xf32>
    %3 = tpu.matmul %1, %2, %cst {dimension_numbers = #tpu.dot_dimension_numbers<[1], [0], [0], [1], [0, 0, 1, 1], [], []>} : vector<8x256xbf16>, vector<256x768xbf16>, vector<8x768xf32> -> vector<8x768xf32>
    %c0_3 = arith.constant 0 : index
    %c0_4 = arith.constant 0 : index
    %4 = vector.load %arg3[%c0_3, %c0_4] : memref<1x768xf32, #tpu.memory_space<vmem>>, vector<1x768xf32>
    %5 = vector.broadcast %4 : vector<1x768xf32> to vector<8x768xf32>
    %6 = arith.addf %3, %5 : vector<8x768xf32>
    %7 = vector.extract_strided_slice %6 {offsets = [0, 0], sizes = [8, 256], strides = [1, 1]} : vector<8x768xf32> to vector<8x256xf32>
    %8 = arith.truncf %7 : vector<8x256xf32> to vector<8x256xbf16>
    %c0_5 = arith.constant 0 : index
    %c0_6 = arith.constant 0 : index
    %9 = vector.load %arg4[%c0_5, %c0_6] : memref<8x256xbf16, #tpu.memory_space<vmem>>, vector<8x256xbf16>
    tpu.vector_store %arg4[%c0_5, %c0_6], %8 {strides = array<i32>} : memref<8x256xbf16, #tpu.memory_space<vmem>>, vector<8x256xbf16>,
    %10 = vector.extract_strided_slice %6 {offsets = [0, 256], sizes = [8, 256], strides = [1, 1]} : vector<8x768xf32> to vector<8x256xf32>
    %11 = arith.truncf %10 : vector<8x256xf32> to vector<8x256xbf16>
    %c0_7 = arith.constant 0 : index
    %c0_8 = arith.constant 0 : index
    %12 = vector.load %arg5[%c0_7, %c0_8] : memref<8x256xbf16, #tpu.memory_space<vmem>>, vector<8x256xbf16>
    tpu.vector_store %arg5[%c0_7, %c0_8], %11 {strides = array<i32>} : memref<8x256xbf16, #tpu.memory_space<vmem>>, vector<8x256xbf16>,
    %13 = vector.extract_strided_slice %6 {offsets = [0, 512], sizes = [8, 256], strides = [1, 1]} : vector<8x768xf32> to vector<8x256xf32>
    %14 = arith.truncf %13 : vector<8x256xf32> to vector<8x256xbf16>
    %c0_9 = arith.constant 0 : index
    %c0_10 = arith.constant 0 : index
    %15 = vector.load %arg6[%c0_9, %c0_10] : memref<8x256xbf16, #tpu.memory_space<vmem>>, vector<8x256xbf16>
    tpu.vector_store %arg6[%c0_9, %c0_10], %14 {strides = array<i32>} : memref<8x256xbf16, #tpu.memory_space<vmem>>, vector<8x256xbf16>,
    return
  }
  func.func @transform_0(%arg0: i32) -> (i32, i32) {
    %c0_i32 = arith.constant 0 : i32
    %c0_i32_0 = arith.constant 0 : i32
    return %arg0, %c0_i32 : i32, i32
  }
  func.func @transform_1(%arg0: i32) -> (i32, i32) {
    %c0_i32 = arith.constant 0 : i32
    %c0_i32_0 = arith.constant 0 : i32
    %c0_i32_1 = arith.constant 0 : i32
    return %c0_i32, %c0_i32_0 : i32, i32
  }
  func.func @transform_2(%arg0: i32) -> (i32, i32) {
    %c0_i32 = arith.constant 0 : i32
    %c0_i32_0 = arith.constant 0 : i32
    %c0_i32_1 = arith.constant 0 : i32
    return %c0_i32, %c0_i32_0 : i32, i32
  }
  func.func @transform_3(%arg0: i32) -> (i32, i32) {
    %c0_i32 = arith.constant 0 : i32
    %c0_i32_0 = arith.constant 0 : i32
    return %arg0, %c0_i32 : i32, i32
  }
  func.func @transform_4(%arg0: i32) -> (i32, i32) {
    %c0_i32 = arith.constant 0 : i32
    %c0_i32_0 = arith.constant 0 : i32
    return %arg0, %c0_i32 : i32, i32
  }
  func.func @transform_5(%arg0: i32) -> (i32, i32) {
    %c0_i32 = arith.constant 0 : i32
    %c0_i32_0 = arith.constant 0 : i32
    return %arg0, %c0_i32 : i32, i32
  }
}

</mosaic_0001>

<llo_original>
// kernel: tpu_custom_call.1
$region0: #{tpu_custom_call.1}
  #allocation0 [shape = 'u32[]', space=smem, size = 0x4, offset = 0x4, fixed_abs, tag = 'smem constant byte address 0x4 - core index']
  #allocation1 [shape = 'u32[72,128]{1,0:T(1,128)}', space=vmem, size = 0x9000, scoped, tag = 'internal scratch']
  %s0 = inlined_call_operand.hbm [shape: f32[16,256], index: 0, kind: input, shape index: {}]
  %s1 = inlined_call_operand.hbm [shape: bf16[256,768], index: 1, kind: input, shape index: {}]
  %s2 = inlined_call_operand.hbm [shape: f32[1,768], index: 2, kind: input, shape index: {}]
  %s3 = inlined_call_operand.hbm [shape: bf16[16,256], index: 3, kind: output, shape index: {0}]
  %s4 = inlined_call_operand.hbm [shape: bf16[16,256], index: 4, kind: output, shape index: {1}]
  %s5 = inlined_call_operand.hbm [shape: bf16[16,256], index: 5, kind: output, shape index: {2}]
  %6 = xla_tuple %s3, %s4, %s5
  %s7 = sld [smem:[#allocation0]]
  $region73: #{tpu_custom_call.1} parent=0
    _
  %s9 = ssub.s32 1, %s7
  %s10 = scalar_select 0, %s9, %s7
  $region1: #{tpu_custom_call.1} parent=0
    #allocation2 [shape = 'u8[16384]{0}', space=vmem, size = 0x4000, scoped, tag = 'input window, operand 0']
    #allocation3 [shape = 's32[2]{0}', space=sflag, size = 0x8, scoped, tag = 'scoped memory for tpu_custom_call.1']
    #allocation4 [shape = 's32[2]{0}', space=sflag, size = 0x8, scoped, tag = 'scoped memory for tpu_custom_call.1']
    #allocation5 [shape = 'u8[393216]{0}', space=vmem, size = 0x60000, scoped, tag = 'input window, operand 1, single buffered']
    #allocation6 [shape = 's32[1]{0}', space=sflag, size = 0x4, scoped, tag = 'scoped memory for tpu_custom_call.1']
    #allocation7 [shape = 'u8[3072]{0}', space=vmem, size = 0xc00, scoped, tag = 'input window, operand 2, single buffered']
    #allocation8 [shape = 'u8[8192]{0}', space=vmem, size = 0x2000, scoped, tag = 'output window, operand 0']
    #allocation9 [shape = 'u8[8192]{0}', space=vmem, size = 0x2000, scoped, tag = 'output window, operand 1']
    #allocation10 [shape = 's32[2]{0}', space=sflag, size = 0x8, scoped, tag = 'scoped memory for tpu_custom_call.1']
    #allocation11 [shape = 'u8[8192]{0}', space=vmem, size = 0x2000, scoped, tag = 'output window, operand 2']
    %11 = vsyncpa [#allocation3], 0
    %s12 = scalar_lea.sflag [#allocation3], 1
    %13 = vsyncpa %s12, 0
    %14 = vsyncpa [#allocation6], 0
    %15 = vsyncpa [#allocation4], 0
    %s16 = scalar_lea.sflag [#allocation4], 1
    %17 = vsyncpa %s16, 0
    %18 = vsyncpa [#allocation10], 0
    %s19 = scalar_lea.sflag [#allocation10], 1
    %20 = vsyncpa %s19, 0
    loop: start=0, step=1, limit=4
    $region2: #{tpu_custom_call.1} parent=1 // loop_pre_header
      _
    $region3: #{tpu_custom_call.1} parent=1 // loop_header
      %s22 = sphi 0, %s26
      %p23 = scmp.ge.s32.totalorder %s22, 4
      %s32 = sphi 0, %s34
      %s35 = sphi 0, %s32
      %s36 = sphi 0, %s35
      %s52 = sphi 0, %s36
      %s56 = sphi 0, %s56
      %s58 = sphi 0, %s56
      %s59 = sphi 0, %s58
      %s73 = sphi 0, %s59
      %s77 = sphi 0, %s77
      %s79 = sphi 0, %s77
      %s80 = sphi 0, %s79
      %s94 = sphi 0, %s80
      %s100 = sphi 0, %s102
      %s103 = sphi 0, %s100
      %s104 = sphi 0, %s103
      %s120 = sphi 0, %s104
      %s126 = sphi 0, %s128
      %s129 = sphi 0, %s126
      %s130 = sphi 0, %s129
      %s146 = sphi 0, %s130
      %s152 = sphi 0, %s154
      %s155 = sphi 0, %s152
      %s156 = sphi 0, %s155
      %s172 = sphi 0, %s156
    $region4: #{tpu_custom_call.1} parent=1 // loop_header_branch
      %25 = sbr.rel (%p23) target = $region8
    $region5: #{tpu_custom_call.1} parent=1 // loop_body
      %s27 = ssub.s32 %s22, 1
      %s28 = ssub.s32 %s22, 2
      %s29 = sadd.s32 %s22, 1
      %s30 = ssub.s32 %s22, %s29
      %p31 = scmp.eq.s32.totalorder %s30, 0
      %s33 = sadd.s32 %s32, 1
      %s34 = scalar_select %p31, %s32, %s33
      %p37 = pneg %p31
      %p38 = scmp.eq.s32.totalorder %s22, 1
      %p39 = por %p37, %p38
      %p40 = scmp.ne.s32.totalorder %s32, %s35
      %p41 = scmp.eq.s32.totalorder %s22, 0
      %p42 = por %p40, %p41
      %p43 = scmp.ne.s32.totalorder %s32, %s35
      %p44 = scmp.eq.s32.totalorder %s27, 1
      %p45 = por %p43, %p44
      %p46 = scmp.ne.s32.totalorder %s35, %s36
      %p47 = scmp.eq.s32.totalorder %s27, 0
      %p48 = por %p46, %p47
      %p49 = scmp.ne.s32.totalorder %s35, %s36
      %p50 = scmp.eq.s32.totalorder %s28, 1
      %p51 = por %p49, %p50
      %p53 = scmp.ne.s32.totalorder %s36, %s52
      %p54 = scmp.eq.s32.totalorder %s28, 0
      %p55 = por %p53, %p54
      %s57 = sadd.s32 %s56, 1
      %p60 = scmp.eq.s32.totalorder %s22, 1
      %p61 = scmp.ne.s32.totalorder %s56, %s58
      %p62 = scmp.eq.s32.totalorder %s22, 0
      %p63 = por %p61, %p62
      %p64 = scmp.ne.s32.totalorder %s56, %s58
      %p65 = scmp.eq.s32.totalorder %s27, 1
      %p66 = por %p64, %p65
      %p67 = scmp.ne.s32.totalorder %s58, %s59
      %p68 = scmp.eq.s32.totalorder %s27, 0
      %p69 = por %p67, %p68
      %p70 = scmp.ne.s32.totalorder %s58, %s59
      %p71 = scmp.eq.s32.totalorder %s28, 1
      %p72 = por %p70, %p71
      %p74 = scmp.ne.s32.totalorder %s59, %s73
      %p75 = scmp.eq.s32.totalorder %s28, 0
      %p76 = por %p74, %p75
      %s78 = sadd.s32 %s77, 1
      %p81 = scmp.eq.s32.totalorder %s22, 1
      %p82 = scmp.ne.s32.totalorder %s77, %s79
      %p83 = scmp.eq.s32.totalorder %s22, 0
      %p84 = por %p82, %p83
      %p85 = scmp.ne.s32.totalorder %s77, %s79
      %p86 = scmp.eq.s32.totalorder %s27, 1
      %p87 = por %p85, %p86
      %p88 = scmp.ne.s32.totalorder %s79, %s80
      %p89 = scmp.eq.s32.totalorder %s27, 0
      %p90 = por %p88, %p89
      %p91 = scmp.ne.s32.totalorder %s79, %s80
      %p92 = scmp.eq.s32.totalorder %s28, 1
      %p93 = por %p91, %p92
      %p95 = scmp.ne.s32.totalorder %s80, %s94
      %p96 = scmp.eq.s32.totalorder %s28, 0
      %p97 = por %p95, %p96
      %s98 = ssub.s32 %s22, %s29
      %p99 = scmp.eq.s32.totalorder %s98, 0
      %s101 = sadd.s32 %s100, 1
      %s102 = scalar_select %p99, %s100, %s101
      %p105 = pneg %p99
      %p106 = scmp.eq.s32.totalorder %s22, 1
      %p107 = por %p105, %p106
      %p108 = scmp.ne.s32.totalorder %s100, %s103
      %p109 = scmp.eq.s32.totalorder %s22, 0
      %p110 = por %p108, %p109
      %p111 = scmp.ne.s32.totalorder %s100, %s103
      %p112 = scmp.eq.s32.totalorder %s27, 1
      %p113 = por %p111, %p112
      %p114 = scmp.ne.s32.totalorder %s103, %s104
      %p115 = scmp.eq.s32.totalorder %s27, 0
      %p116 = por %p114, %p115
      %p117 = scmp.ne.s32.totalorder %s103, %s104
      %p118 = scmp.eq.s32.totalorder %s28, 1
      %p119 = por %p117, %p118
      %p121 = scmp.ne.s32.totalorder %s104, %s120
      %p122 = scmp.eq.s32.totalorder %s28, 0
      %p123 = por %p121, %p122
      %s124 = ssub.s32 %s22, %s29
      %p125 = scmp.eq.s32.totalorder %s124, 0
      %s127 = sadd.s32 %s126, 1
      %s128 = scalar_select %p125, %s126, %s127
      %p131 = pneg %p125
      %p132 = scmp.eq.s32.totalorder %s22, 1
      %p133 = por %p131, %p132
      %p134 = scmp.ne.s32.totalorder %s126, %s129
      %p135 = scmp.eq.s32.totalorder %s22, 0
      %p136 = por %p134, %p135
      %p137 = scmp.ne.s32.totalorder %s126, %s129
      %p138 = scmp.eq.s32.totalorder %s27, 1
      %p139 = por %p137, %p138
      %p140 = scmp.ne.s32.totalorder %s129, %s130
      %p141 = scmp.eq.s32.totalorder %s27, 0
      %p142 = por %p140, %p141
      %p143 = scmp.ne.s32.totalorder %s129, %s130
      %p144 = scmp.eq.s32.totalorder %s28, 1
      %p145 = por %p143, %p144
      %p147 = scmp.ne.s32.totalorder %s130, %s146
      %p148 = scmp.eq.s32.totalorder %s28, 0
      %p149 = por %p147, %p148
      %s150 = ssub.s32 %s22, %s29
      %p151 = scmp.eq.s32.totalorder %s150, 0
      %s153 = sadd.s32 %s152, 1
      %s154 = scalar_select %p151, %s152, %s153
      %p157 = pneg %p151
      %p158 = scmp.eq.s32.totalorder %s22, 1
      %p159 = por %p157, %p158
      %p160 = scmp.ne.s32.totalorder %s152, %s155
      %p161 = scmp.eq.s32.totalorder %s22, 0
      %p162 = por %p160, %p161
      %p163 = scmp.ne.s32.totalorder %s152, %s155
      %p164 = scmp.eq.s32.totalorder %s27, 1
      %p165 = por %p163, %p164
      %p166 = scmp.ne.s32.totalorder %s155, %s156
      %p167 = scmp.eq.s32.totalorder %s27, 0
      %p168 = por %p166, %p167
      %p169 = scmp.ne.s32.totalorder %s155, %s156
      %p170 = scmp.eq.s32.totalorder %s28, 1
      %p171 = por %p169, %p170
      %p173 = scmp.ne.s32.totalorder %s156, %s172
      %p174 = scmp.eq.s32.totalorder %s28, 0
      %p175 = por %p173, %p174
      %p176 = scmp.le.s32.totalorder 1, %s22
      %p177 = scmp.lt.s32.totalorder %s22, 3
      %p178 = pnand %p176, %p177
      %p179 = pneg %p178
      // Predicated region
      $region9: #{tpu_custom_call.1} parent=5 // pred_check
        _
      $region10: #{tpu_custom_call.1} parent=5 // pred_check_branch
        %181 = sbr.rel (%p178) target = $region12
      $region11: #{tpu_custom_call.1} parent=5 // pred_region
        %s182 = ssub.s32 %s22, 1
        // Predicated region
        $region13: #{tpu_custom_call.1} parent=11 // pred_check
          %p183 = pneg %p69
        $region14: #{tpu_custom_call.1} parent=11 // pred_check_branch
          %185 = sbr.rel (%p183) target = $region16
        $region15: #{tpu_custom_call.1} parent=11 // pred_region
          %187 = vsyncadd [#allocation6], 0
          %s188 = sshll.u32 %s1, 4
          %s189 = int_to_ptr.hbm [resolvable:$true] %s188
          %s190 = sshll.u32 [#allocation5], 4
          %s191 = int_to_ptr.vmem [resolvable:$true] %s190
          %196 = dma.hbm_to_vmem [thread:$0]  %s189, 12288, %s191, [#allocation6], 384, 384, 24
        $region16: #{tpu_custom_call.1} parent=11 // pred_fallthru
          _
        // Predicated region
        $region17: #{tpu_custom_call.1} parent=11 // pred_check
          %p197 = pneg %p90
        $region18: #{tpu_custom_call.1} parent=11 // pred_check_branch
          %199 = sbr.rel (%p197) target = $region20
        $region19: #{tpu_custom_call.1} parent=11 // pred_region
          %201 = vsyncadd [#allocation6], 0
          %s203 = sshll.u32 %s2, 4
          %s204 = int_to_ptr.hbm [resolvable:$true] %s203
          %s205 = sshll.u32 [#allocation7], 4
          %s206 = int_to_ptr.vmem [resolvable:$true] %s205
          %208 = dma.hbm_to_vmem [thread:$0]  %s204, 96, %s206, [#allocation6]
        $region20: #{tpu_custom_call.1} parent=11 // pred_fallthru
          _
      $region12: #{tpu_custom_call.1} parent=5 // pred_fallthru
        _
      %p209 = scmp.lt.s32.totalorder %s22, 2
      // Predicated region
      $region21: #{tpu_custom_call.1} parent=5 // pred_check
        %p210 = pneg %p209
      $region22: #{tpu_custom_call.1} parent=5 // pred_check_branch
        %212 = sbr.rel (%p210) target = $region24
      $region23: #{tpu_custom_call.1} parent=5 // pred_region
        // Predicated region
        $region25: #{tpu_custom_call.1} parent=23 // pred_check
          %p213 = pneg %p42
        $region26: #{tpu_custom_call.1} parent=23 // pred_check_branch
          %215 = sbr.rel (%p213) target = $region28
        $region27: #{tpu_custom_call.1} parent=23 // pred_region
          %s216 = sand.u32 %s32, 1
          %s217 = scalar_lea.sflag [#allocation3], %s216
          %s218 = sand.u32 %s32, 1
          %s219 = smul.addr %s218, 16
          %s220 = scalar_lea.vmem [#allocation2], %s219
          %222 = vsyncadd %s217, 0
          %s223 = smul.addr %s22, 2
          %s224 = smul.addr %s223, 8
          %s225 = scalar_lea.hbm %s0, %s224
          %s227 = sshll.u32 %s225, 4
          %s228 = int_to_ptr.hbm [resolvable:$true] %s227
          %s229 = sshll.u32 %s220, 4
          %s230 = int_to_ptr.vmem [resolvable:$true] %s229
          %232 = dma.hbm_to_vmem [thread:$0]  %s228, 256, %s230, %s217
        $region28: #{tpu_custom_call.1} parent=23 // pred_fallthru
          _
      $region24: #{tpu_custom_call.1} parent=5 // pred_fallthru
        _
      %p233 = scmp.le.s32.totalorder 1, %s22
      %p234 = scmp.lt.s32.totalorder %s22, 3
      %p235 = pnand %p233, %p234
      %p236 = pneg %p235
      // Predicated region
      $region29: #{tpu_custom_call.1} parent=5 // pred_check
        _
      $region30: #{tpu_custom_call.1} parent=5 // pred_check_branch
        %238 = sbr.rel (%p235) target = $region32
      $region31: #{tpu_custom_call.1} parent=5 // pred_region
        %s239 = ssub.s32 %s22, 1
        %s240 = sand.u32 %s35, 1
        %s241 = scalar_lea.sflag [#allocation3], %s240
        %s242 = sand.u32 %s35, 1
        %s243 = smul.addr %s242, 16
        %s244 = scalar_lea.vmem [#allocation2], %s243
        // Predicated region
        $region33: #{tpu_custom_call.1} parent=31 // pred_check
          %p245 = pneg %p48
        $region34: #{tpu_custom_call.1} parent=31 // pred_check_branch
          %247 = sbr.rel (%p245) target = $region36
        $region35: #{tpu_custom_call.1} parent=31 // pred_region
          %249 = dma.done %s241, 256
        $region36: #{tpu_custom_call.1} parent=31 // pred_fallthru
          _
        // Predicated region
        $region37: #{tpu_custom_call.1} parent=31 // pred_check
          %p250 = pneg %p69
        $region38: #{tpu_custom_call.1} parent=31 // pred_check_branch
          %252 = sbr.rel (%p250) target = $region40
        $region39: #{tpu_custom_call.1} parent=31 // pred_region
          %254 = dma.done [#allocation6], 12288
        $region40: #{tpu_custom_call.1} parent=31 // pred_fallthru
          _
        // Predicated region
        $region41: #{tpu_custom_call.1} parent=31 // pred_check
          %p255 = pneg %p90
        $region42: #{tpu_custom_call.1} parent=31 // pred_check_branch
          %257 = sbr.rel (%p255) target = $region44
        $region43: #{tpu_custom_call.1} parent=31 // pred_region
          %259 = dma.done [#allocation6], 96
        $region44: #{tpu_custom_call.1} parent=31 // pred_fallthru
          _
        %s260 = sand.u32 %s35, 1
        %s261 = scalar_lea.sflag [#allocation3], %s260
        %s262 = sand.u32 %s35, 1
        %s263 = smul.addr %s262, 16
        %s264 = scalar_lea.vmem [#allocation2], %s263
        %p265 = pneg %p48
        %p266 = pneg %p45
        %p267 = pneg %p69
        %p268 = pneg %p66
        %p269 = pneg %p90
        %p270 = pneg %p87
        %p271 = pneg %p116
        %p272 = pneg %p113
        %s273 = sand.u32 %s103, 1
        %s274 = scalar_lea.sflag [#allocation4], %s273
        %s275 = sand.u32 %s103, 1
        %s276 = smul.addr %s275, 8
        %s277 = scalar_lea.vmem [#allocation8], %s276
        %p278 = pneg %p142
        %p279 = pneg %p139
        %s280 = sand.u32 %s27, 1
        %s281 = scalar_lea.sflag [#allocation10], %s280
        %s282 = sand.u32 %s129, 1
        %s283 = smul.addr %s282, 8
        %s284 = scalar_lea.vmem [#allocation9], %s283
        %p285 = pneg %p168
        %p286 = pneg %p165
        %s287 = sand.u32 %s27, 1
        %s288 = scalar_lea.sflag [#allocation10], %s287
        %s289 = sand.u32 %s155, 1
        %s290 = smul.addr %s289, 8
        %s291 = scalar_lea.vmem [#allocation11], %s290
        %v292 = vld [vmem:[%s244] sm:$0xff]
        %v293 = vld [vmem:[%s244 + $0x8] sm:$0xff]
        %v294 = vpack.c.bf16 %v292, %v292
        %v295 = vpack.c.bf16 %v293, %v293
        %v296 = vld [vmem:[#allocation5] sm:$0xff]
        %v297 = vld [vmem:[#allocation5 + $0x8] sm:$0xff]
        %v298 = vld [vmem:[#allocation5 + $0x10] sm:$0xff]
        %v299 = vld [vmem:[#allocation5 + $0x18] sm:$0xff]
        %v300 = vld [vmem:[#allocation5 + $0x20] sm:$0xff]
        %v301 = vld [vmem:[#allocation5 + $0x28] sm:$0xff]
        %v302 = vld [vmem:[#allocation5 + $0x30] sm:$0xff]
        %v303 = vld [vmem:[#allocation5 + $0x38] sm:$0xff]
        %v304 = vld [vmem:[#allocation5 + $0x40] sm:$0xff]
        %v305 = vld [vmem:[#allocation5 + $0x48] sm:$0xff]
        %v306 = vld [vmem:[#allocation5 + $0x50] sm:$0xff]
        %v307 = vld [vmem:[#allocation5 + $0x58] sm:$0xff]
        %v308 = vld [vmem:[#allocation5 + $0x60] sm:$0xff]
        %v309 = vld [vmem:[#allocation5 + $0x68] sm:$0xff]
        %v310 = vld [vmem:[#allocation5 + $0x70] sm:$0xff]
        %v311 = vld [vmem:[#allocation5 + $0x78] sm:$0xff]
        %v312 = vld [vmem:[#allocation5 + $0x80] sm:$0xff]
        %v313 = vld [vmem:[#allocation5 + $0x88] sm:$0xff]
        %v314 = vld [vmem:[#allocation5 + $0x90] sm:$0xff]
        %v315 = vld [vmem:[#allocation5 + $0x98] sm:$0xff]
        %v316 = vld [vmem:[#allocation5 + $0xa0] sm:$0xff]
        %v317 = vld [vmem:[#allocation5 + $0xa8] sm:$0xff]
        %v318 = vld [vmem:[#allocation5 + $0xb0] sm:$0xff]
        %v319 = vld [vmem:[#allocation5 + $0xb8] sm:$0xff]
        %v320 = vld [vmem:[#allocation5 + $0xc0] sm:$0xff]
        %v321 = vld [vmem:[#allocation5 + $0xc8] sm:$0xff]
        %v322 = vld [vmem:[#allocation5 + $0xd0] sm:$0xff]
        %v323 = vld [vmem:[#allocation5 + $0xd8] sm:$0xff]
        %v324 = vld [vmem:[#allocation5 + $0xe0] sm:$0xff]
        %v325 = vld [vmem:[#allocation5 + $0xe8] sm:$0xff]
        %v326 = vld [vmem:[#allocation5 + $0xf0] sm:$0xff]
        %v327 = vld [vmem:[#allocation5 + $0xf8] sm:$0xff]
        %v328 = vld [vmem:[#allocation5 + $0x100] sm:$0xff]
        %v329 = vld [vmem:[#allocation5 + $0x108] sm:$0xff]
        %v330 = vld [vmem:[#allocation5 + $0x110] sm:$0xff]
        %v331 = vld [vmem:[#allocation5 + $0x118] sm:$0xff]
        %v332 = vld [vmem:[#allocation5 + $0x120] sm:$0xff]
        %v333 = vld [vmem:[#allocation5 + $0x128] sm:$0xff]
        %v334 = vld [vmem:[#allocation5 + $0x130] sm:$0xff]
        %v335 = vld [vmem:[#allocation5 + $0x138] sm:$0xff]
        %v336 = vld [vmem:[#allocation5 + $0x140] sm:$0xff]
        %v337 = vld [vmem:[#allocation5 + $0x148] sm:$0xff]
        %v338 = vld [vmem:[#allocation5 + $0x150] sm:$0xff]
        %v339 = vld [vmem:[#allocation5 + $0x158] sm:$0xff]
        %v340 = vld [vmem:[#allocation5 + $0x160] sm:$0xff]
        %v341 = vld [vmem:[#allocation5 + $0x168] sm:$0xff]
        %v342 = vld [vmem:[#allocation5 + $0x170] sm:$0xff]
        %v343 = vld [vmem:[#allocation5 + $0x178] sm:$0xff]
        %v344 = vld [vmem:[#allocation5 + $0x180] sm:$0xff]
        %v345 = vld [vmem:[#allocation5 + $0x188] sm:$0xff]
        %v346 = vld [vmem:[#allocation5 + $0x190] sm:$0xff]
        %v347 = vld [vmem:[#allocation5 + $0x198] sm:$0xff]
        %v348 = vld [vmem:[#allocation5 + $0x1a0] sm:$0xff]
        %v349 = vld [vmem:[#allocation5 + $0x1a8] sm:$0xff]
        %v350 = vld [vmem:[#allocation5 + $0x1b0] sm:$0xff]
        %v351 = vld [vmem:[#allocation5 + $0x1b8] sm:$0xff]
        %v352 = vld [vmem:[#allocation5 + $0x1c0] sm:$0xff]
        %v353 = vld [vmem:[#allocation5 + $0x1c8] sm:$0xff]
        %v354 = vld [vmem:[#allocation5 + $0x1d0] sm:$0xff]
        %v355 = vld [vmem:[#allocation5 + $0x1d8] sm:$0xff]
        %v356 = vld [vmem:[#allocation5 + $0x1e0] sm:$0xff]
        %v357 = vld [vmem:[#allocation5 + $0x1e8] sm:$0xff]
        %v358 = vld [vmem:[#allocation5 + $0x1f0] sm:$0xff]
        %v359 = vld [vmem:[#allocation5 + $0x1f8] sm:$0xff]
        %v360 = vld [vmem:[#allocation5 + $0x200] sm:$0xff]
        %v361 = vld [vmem:[#allocation5 + $0x208] sm:$0xff]
        %v362 = vld [vmem:[#allocation5 + $0x210] sm:$0xff]
        %v363 = vld [vmem:[#allocation5 + $0x218] sm:$0xff]
        %v364 = vld [vmem:[#allocation5 + $0x220] sm:$0xff]
        %v365 = vld [vmem:[#allocation5 + $0x228] sm:$0xff]
        %v366 = vld [vmem:[#allocation5 + $0x230] sm:$0xff]
        %v367 = vld [vmem:[#allocation5 + $0x238] sm:$0xff]
        %v368 = vld [vmem:[#allocation5 + $0x240] sm:$0xff]
        %v369 = vld [vmem:[#allocation5 + $0x248] sm:$0xff]
        %v370 = vld [vmem:[#allocation5 + $0x250] sm:$0xff]
        %v371 = vld [vmem:[#allocation5 + $0x258] sm:$0xff]
        %v372 = vld [vmem:[#allocation5 + $0x260] sm:$0xff]
        %v373 = vld [vmem:[#allocation5 + $0x268] sm:$0xff]
        %v374 = vld [vmem:[#allocation5 + $0x270] sm:$0xff]
        %v375 = vld [vmem:[#allocation5 + $0x278] sm:$0xff]
        %v376 = vld [vmem:[#allocation5 + $0x280] sm:$0xff]
        %v377 = vld [vmem:[#allocation5 + $0x288] sm:$0xff]
        %v378 = vld [vmem:[#allocation5 + $0x290] sm:$0xff]
        %v379 = vld [vmem:[#allocation5 + $0x298] sm:$0xff]
        %v380 = vld [vmem:[#allocation5 + $0x2a0] sm:$0xff]
        %v381 = vld [vmem:[#allocation5 + $0x2a8] sm:$0xff]
        %v382 = vld [vmem:[#allocation5 + $0x2b0] sm:$0xff]
        %v383 = vld [vmem:[#allocation5 + $0x2b8] sm:$0xff]
        %v384 = vld [vmem:[#allocation5 + $0x2c0] sm:$0xff]
        %v385 = vld [vmem:[#allocation5 + $0x2c8] sm:$0xff]
        %v386 = vld [vmem:[#allocation5 + $0x2d0] sm:$0xff]
        %v387 = vld [vmem:[#allocation5 + $0x2d8] sm:$0xff]
        %v388 = vld [vmem:[#allocation5 + $0x2e0] sm:$0xff]
        %v389 = vld [vmem:[#allocation5 + $0x2e8] sm:$0xff]
        %v390 = vld [vmem:[#allocation5 + $0x2f0] sm:$0xff]
        %v391 = vld [vmem:[#allocation5 + $0x2f8] sm:$0xff]
        %v392 = vld [vmem:[#allocation7] sm:$0x3f]
        %v394 = vperm.slane %v392, 0
        %v395 = vperm.slane %v392, 1
        %v396 = vperm.slane %v392, 2
        %v397 = vperm.slane %v392, 3
        %v398 = vperm.slane %v392, 4
        %v399 = vperm.slane %v392, 5
        %v502 = vunpack.c.l.b16 %v296
        %v503 = vunpack.c.h.b16 %v296
        %v504 = vunpack.c.l.b16 %v297
        %v505 = vunpack.c.h.b16 %v297
        %v506 = vunpack.c.l.b16 %v298
        %v507 = vunpack.c.h.b16 %v298
        %v508 = vunpack.c.l.b16 %v299
        %v509 = vunpack.c.h.b16 %v299
        %v510 = vunpack.c.l.b16 %v300
        %v511 = vunpack.c.h.b16 %v300
        %v512 = vunpack.c.l.b16 %v301
        %v513 = vunpack.c.h.b16 %v301
        %v514 = vunpack.c.l.b16 %v302
        %v515 = vunpack.c.h.b16 %v302
        %v516 = vunpack.c.l.b16 %v303
        %v517 = vunpack.c.h.b16 %v303
        %v518 = vunpack.c.l.b16 %v304
        %v519 = vunpack.c.h.b16 %v304
        %v520 = vunpack.c.l.b16 %v305
        %v521 = vunpack.c.h.b16 %v305
        %v522 = vunpack.c.l.b16 %v306
        %v523 = vunpack.c.h.b16 %v306
        %v524 = vunpack.c.l.b16 %v307
        %v525 = vunpack.c.h.b16 %v307
        %v526 = vunpack.c.l.b16 %v308
        %v527 = vunpack.c.h.b16 %v308
        %v528 = vunpack.c.l.b16 %v309
        %v529 = vunpack.c.h.b16 %v309
        %v530 = vunpack.c.l.b16 %v310
        %v531 = vunpack.c.h.b16 %v310
        %v532 = vunpack.c.l.b16 %v311
        %v533 = vunpack.c.h.b16 %v311
        %v534 = vunpack.c.l.b16 %v312
        %v535 = vunpack.c.h.b16 %v312
        %v536 = vunpack.c.l.b16 %v313
        %v537 = vunpack.c.h.b16 %v313
        %v538 = vunpack.c.l.b16 %v314
        %v539 = vunpack.c.h.b16 %v314
        %v540 = vunpack.c.l.b16 %v315
        %v541 = vunpack.c.h.b16 %v315
        %v542 = vunpack.c.l.b16 %v316
        %v543 = vunpack.c.h.b16 %v316
        %v544 = vunpack.c.l.b16 %v317
        %v545 = vunpack.c.h.b16 %v317
        %v546 = vunpack.c.l.b16 %v318
        %v547 = vunpack.c.h.b16 %v318
        %v548 = vunpack.c.l.b16 %v319
        %v549 = vunpack.c.h.b16 %v319
        %v550 = vunpack.c.l.b16 %v320
        %v551 = vunpack.c.h.b16 %v320
        %v552 = vunpack.c.l.b16 %v321
        %v553 = vunpack.c.h.b16 %v321
        %v554 = vunpack.c.l.b16 %v322
        %v555 = vunpack.c.h.b16 %v322
        %v556 = vunpack.c.l.b16 %v323
        %v557 = vunpack.c.h.b16 %v323
        %v558 = vunpack.c.l.b16 %v324
        %v559 = vunpack.c.h.b16 %v324
        %v560 = vunpack.c.l.b16 %v325
        %v561 = vunpack.c.h.b16 %v325
        %v562 = vunpack.c.l.b16 %v326
        %v563 = vunpack.c.h.b16 %v326
        %v564 = vunpack.c.l.b16 %v327
        %v565 = vunpack.c.h.b16 %v327
        %v566 = vunpack.c.l.b16 %v328
        %v567 = vunpack.c.h.b16 %v328
        %v568 = vunpack.c.l.b16 %v329
        %v569 = vunpack.c.h.b16 %v329
        %v570 = vunpack.c.l.b16 %v330
        %v571 = vunpack.c.h.b16 %v330
        %v572 = vunpack.c.l.b16 %v331
        %v573 = vunpack.c.h.b16 %v331
        %v574 = vunpack.c.l.b16 %v332
        %v575 = vunpack.c.h.b16 %v332
        %v576 = vunpack.c.l.b16 %v333
        %v577 = vunpack.c.h.b16 %v333
        %v578 = vunpack.c.l.b16 %v334
        %v579 = vunpack.c.h.b16 %v334
        %v580 = vunpack.c.l.b16 %v335
        %v581 = vunpack.c.h.b16 %v335
        %v582 = vunpack.c.l.b16 %v336
        %v583 = vunpack.c.h.b16 %v336
        %v584 = vunpack.c.l.b16 %v337
        %v585 = vunpack.c.h.b16 %v337
        %v586 = vunpack.c.l.b16 %v338
        %v587 = vunpack.c.h.b16 %v338
        %v588 = vunpack.c.l.b16 %v339
        %v589 = vunpack.c.h.b16 %v339
        %v590 = vunpack.c.l.b16 %v340
        %v591 = vunpack.c.h.b16 %v340
        %v592 = vunpack.c.l.b16 %v341
        %v593 = vunpack.c.h.b16 %v341
        %v594 = vunpack.c.l.b16 %v342
        %v595 = vunpack.c.h.b16 %v342
        %v596 = vunpack.c.l.b16 %v343
        %v597 = vunpack.c.h.b16 %v343
        %v598 = vunpack.c.l.b16 %v344
        %v599 = vunpack.c.h.b16 %v344
        %v600 = vunpack.c.l.b16 %v345
        %v601 = vunpack.c.h.b16 %v345
        %v602 = vunpack.c.l.b16 %v346
        %v603 = vunpack.c.h.b16 %v346
        %v604 = vunpack.c.l.b16 %v347
        %v605 = vunpack.c.h.b16 %v347
        %v606 = vunpack.c.l.b16 %v348
        %v607 = vunpack.c.h.b16 %v348
        %v608 = vunpack.c.l.b16 %v349
        %v609 = vunpack.c.h.b16 %v349
        %v610 = vunpack.c.l.b16 %v350
        %v611 = vunpack.c.h.b16 %v350
        %v612 = vunpack.c.l.b16 %v351
        %v613 = vunpack.c.h.b16 %v351
        %v614 = vunpack.c.l.b16 %v352
        %v615 = vunpack.c.h.b16 %v352
        %v616 = vunpack.c.l.b16 %v353
        %v617 = vunpack.c.h.b16 %v353
        %v618 = vunpack.c.l.b16 %v354
        %v619 = vunpack.c.h.b16 %v354
        %v620 = vunpack.c.l.b16 %v355
        %v621 = vunpack.c.h.b16 %v355
        %v622 = vunpack.c.l.b16 %v356
        %v623 = vunpack.c.h.b16 %v356
        %v624 = vunpack.c.l.b16 %v357
        %v625 = vunpack.c.h.b16 %v357
        %v626 = vunpack.c.l.b16 %v358
        %v627 = vunpack.c.h.b16 %v358
        %v628 = vunpack.c.l.b16 %v359
        %v629 = vunpack.c.h.b16 %v359
        %v630 = vunpack.c.l.b16 %v360
        %v631 = vunpack.c.h.b16 %v360
        %v632 = vunpack.c.l.b16 %v361
        %v633 = vunpack.c.h.b16 %v361
        %v634 = vunpack.c.l.b16 %v362
        %v635 = vunpack.c.h.b16 %v362
        %v636 = vunpack.c.l.b16 %v363
        %v637 = vunpack.c.h.b16 %v363
        %v638 = vunpack.c.l.b16 %v364
        %v639 = vunpack.c.h.b16 %v364
        %v640 = vunpack.c.l.b16 %v365
        %v641 = vunpack.c.h.b16 %v365
        %v642 = vunpack.c.l.b16 %v366
        %v643 = vunpack.c.h.b16 %v366
        %v644 = vunpack.c.l.b16 %v367
        %v645 = vunpack.c.h.b16 %v367
        %v646 = vunpack.c.l.b16 %v368
        %v647 = vunpack.c.h.b16 %v368
        %v648 = vunpack.c.l.b16 %v369
        %v649 = vunpack.c.h.b16 %v369
        %v650 = vunpack.c.l.b16 %v370
        %v651 = vunpack.c.h.b16 %v370
        %v652 = vunpack.c.l.b16 %v371
        %v653 = vunpack.c.h.b16 %v371
        %v654 = vunpack.c.l.b16 %v372
        %v655 = vunpack.c.h.b16 %v372
        %v656 = vunpack.c.l.b16 %v373
        %v657 = vunpack.c.h.b16 %v373
        %v658 = vunpack.c.l.b16 %v374
        %v659 = vunpack.c.h.b16 %v374
        %v660 = vunpack.c.l.b16 %v375
        %v661 = vunpack.c.h.b16 %v375
        %v662 = vunpack.c.l.b16 %v376
        %v663 = vunpack.c.h.b16 %v376
        %v664 = vunpack.c.l.b16 %v377
        %v665 = vunpack.c.h.b16 %v377
        %v666 = vunpack.c.l.b16 %v378
        %v667 = vunpack.c.h.b16 %v378
        %v668 = vunpack.c.l.b16 %v379
        %v669 = vunpack.c.h.b16 %v379
        %v670 = vunpack.c.l.b16 %v380
        %v671 = vunpack.c.h.b16 %v380
        %v672 = vunpack.c.l.b16 %v381
        %v673 = vunpack.c.h.b16 %v381
        %v674 = vunpack.c.l.b16 %v382
        %v675 = vunpack.c.h.b16 %v382
        %v676 = vunpack.c.l.b16 %v383
        %v677 = vunpack.c.h.b16 %v383
        %v678 = vunpack.c.l.b16 %v384
        %v679 = vunpack.c.h.b16 %v384
        %v680 = vunpack.c.l.b16 %v385
        %v681 = vunpack.c.h.b16 %v385
        %v682 = vunpack.c.l.b16 %v386
        %v683 = vunpack.c.h.b16 %v386
        %v684 = vunpack.c.l.b16 %v387
        %v685 = vunpack.c.h.b16 %v387
        %v686 = vunpack.c.l.b16 %v388
        %v687 = vunpack.c.h.b16 %v388
        %v688 = vunpack.c.l.b16 %v389
        %v689 = vunpack.c.h.b16 %v389
        %v690 = vunpack.c.l.b16 %v390
        %v691 = vunpack.c.h.b16 %v390
        %v692 = vunpack.c.l.b16 %v391
        %v693 = vunpack.c.h.b16 %v391
        %v694 = vpack.c.b16 %v508, %v502
        %v695 = vpack.c.b16 %v509, %v503
        %v696 = vpack.c.b16 %v510, %v504
        %v697 = vpack.c.b16 %v511, %v505
        %v698 = vpack.c.b16 %v512, %v506
        %v699 = vpack.c.b16 %v513, %v507
        %v700 = vpack.c.b16 %v520, %v514
        %v701 = vpack.c.b16 %v521, %v515
        %v702 = vpack.c.b16 %v522, %v516
        %v703 = vpack.c.b16 %v523, %v517
        %v704 = vpack.c.b16 %v524, %v518
        %v705 = vpack.c.b16 %v525, %v519
        %v706 = vpack.c.b16 %v532, %v526
        %v707 = vpack.c.b16 %v533, %v527
        %v708 = vpack.c.b16 %v534, %v528
        %v709 = vpack.c.b16 %v535, %v529
        %v710 = vpack.c.b16 %v536, %v530
        %v711 = vpack.c.b16 %v537, %v531
        %v712 = vpack.c.b16 %v544, %v538
        %v713 = vpack.c.b16 %v545, %v539
        %v714 = vpack.c.b16 %v546, %v540
        %v715 = vpack.c.b16 %v547, %v541
        %v716 = vpack.c.b16 %v548, %v542
        %v717 = vpack.c.b16 %v549, %v543
        %v718 = vpack.c.b16 %v556, %v550
        %v719 = vpack.c.b16 %v557, %v551
        %v720 = vpack.c.b16 %v558, %v552
        %v721 = vpack.c.b16 %v559, %v553
        %v722 = vpack.c.b16 %v560, %v554
        %v723 = vpack.c.b16 %v561, %v555
        %v724 = vpack.c.b16 %v568, %v562
        %v725 = vpack.c.b16 %v569, %v563
        %v726 = vpack.c.b16 %v570, %v564
        %v727 = vpack.c.b16 %v571, %v565
        %v728 = vpack.c.b16 %v572, %v566
        %v729 = vpack.c.b16 %v573, %v567
        %v730 = vpack.c.b16 %v580, %v574
        %v731 = vpack.c.b16 %v581, %v575
        %v732 = vpack.c.b16 %v582, %v576
        %v733 = vpack.c.b16 %v583, %v577
        %v734 = vpack.c.b16 %v584, %v578
        %v735 = vpack.c.b16 %v585, %v579
        %v736 = vpack.c.b16 %v592, %v586
        %v737 = vpack.c.b16 %v593, %v587
        %v738 = vpack.c.b16 %v594, %v588
        %v739 = vpack.c.b16 %v595, %v589
        %v740 = vpack.c.b16 %v596, %v590
        %v741 = vpack.c.b16 %v597, %v591
        %v742 = vpack.c.b16 %v604, %v598
        %v743 = vpack.c.b16 %v605, %v599
        %v744 = vpack.c.b16 %v606, %v600
        %v745 = vpack.c.b16 %v607, %v601
        %v746 = vpack.c.b16 %v608, %v602
        %v747 = vpack.c.b16 %v609, %v603
        %v748 = vpack.c.b16 %v616, %v610
        %v749 = vpack.c.b16 %v617, %v611
        %v750 = vpack.c.b16 %v618, %v612
        %v751 = vpack.c.b16 %v619, %v613
        %v752 = vpack.c.b16 %v620, %v614
        %v753 = vpack.c.b16 %v621, %v615
        %v754 = vpack.c.b16 %v628, %v622
        %v755 = vpack.c.b16 %v629, %v623
        %v756 = vpack.c.b16 %v630, %v624
        %v757 = vpack.c.b16 %v631, %v625
        %v758 = vpack.c.b16 %v632, %v626
        %v759 = vpack.c.b16 %v633, %v627
        %v760 = vpack.c.b16 %v640, %v634
        %v761 = vpack.c.b16 %v641, %v635
        %v762 = vpack.c.b16 %v642, %v636
        %v763 = vpack.c.b16 %v643, %v637
        %v764 = vpack.c.b16 %v644, %v638
        %v765 = vpack.c.b16 %v645, %v639
        %v766 = vpack.c.b16 %v652, %v646
        %v767 = vpack.c.b16 %v653, %v647
        %v768 = vpack.c.b16 %v654, %v648
        %v769 = vpack.c.b16 %v655, %v649
        %v770 = vpack.c.b16 %v656, %v650
        %v771 = vpack.c.b16 %v657, %v651
        %v772 = vpack.c.b16 %v664, %v658
        %v773 = vpack.c.b16 %v665, %v659
        %v774 = vpack.c.b16 %v666, %v660
        %v775 = vpack.c.b16 %v667, %v661
        %v776 = vpack.c.b16 %v668, %v662
        %v777 = vpack.c.b16 %v669, %v663
        %v778 = vpack.c.b16 %v676, %v670
        %v779 = vpack.c.b16 %v677, %v671
        %v780 = vpack.c.b16 %v678, %v672
        %v781 = vpack.c.b16 %v679, %v673
        %v782 = vpack.c.b16 %v680, %v674
        %v783 = vpack.c.b16 %v681, %v675
        %v784 = vpack.c.b16 %v688, %v682
        %v785 = vpack.c.b16 %v689, %v683
        %v786 = vpack.c.b16 %v690, %v684
        %v787 = vpack.c.b16 %v691, %v685
        %v788 = vpack.c.b16 %v692, %v686
        %v789 = vpack.c.b16 %v693, %v687
        %886 = vmatpush.bf16.msra.mxu0 %v736
        %887 = vmatpush.bf16.msra.mxu0 %v730
        %888 = vmatpush.bf16.msra.mxu0 %v724
        %889 = vmatpush.bf16.msra.mxu0 %v718
        %890 = vmatpush.bf16.msra.mxu0 %v712
        %891 = vmatpush.bf16.msra.mxu0 %v706
        %892 = vmatpush.bf16.msra.mxu0 %v700
        %893 = vmatpush.bf16.msra.mxu0 %v694
        %894 = vmatmul.bf16.gmra.mxu0 %v294
        %v895 = vpop.f32.mrf.mxu0
        %v896 = vadd.f32 %v394, %v895
        %v897 = vpop.f32.mrf.mxu0
        %898 = vdwg.mxu0
        %899 = vmatpush.bf16.msra.mxu0 %v784
        %900 = vmatpush.bf16.msra.mxu0 %v778
        %901 = vmatpush.bf16.msra.mxu0 %v772
        %902 = vmatpush.bf16.msra.mxu0 %v766
        %903 = vmatpush.bf16.msra.mxu0 %v760
        %904 = vmatpush.bf16.msra.mxu0 %v754
        %905 = vmatpush.bf16.msra.mxu0 %v748
        %906 = vmatpush.bf16.msra.mxu0 %v742
        %907 = vmatmul.bf16.gmra.mxu0 %v295
        %v908 = vpop.f32.mrf.mxu0
        %v909 = vadd.f32 %v896, %v908
        %v910 = vpop.f32.mrf.mxu0
        %911 = vdwg.mxu0
        %912 = vmatpush.bf16.msra.mxu0 %v737
        %913 = vmatpush.bf16.msra.mxu0 %v731
        %914 = vmatpush.bf16.msra.mxu0 %v725
        %915 = vmatpush.bf16.msra.mxu0 %v719
        %916 = vmatpush.bf16.msra.mxu0 %v713
        %917 = vmatpush.bf16.msra.mxu0 %v707
        %918 = vmatpush.bf16.msra.mxu0 %v701
        %919 = vmatpush.bf16.msra.mxu0 %v695
        %920 = vmatmul.bf16.gmra.mxu0 %v294
        %v921 = vpop.f32.mrf.mxu0
        %v922 = vadd.f32 %v395, %v921
        %v923 = vpop.f32.mrf.mxu0
        %924 = vdwg.mxu0
        %925 = vmatpush.bf16.msra.mxu0 %v785
        %926 = vmatpush.bf16.msra.mxu0 %v779
        %927 = vmatpush.bf16.msra.mxu0 %v773
        %928 = vmatpush.bf16.msra.mxu0 %v767
        %929 = vmatpush.bf16.msra.mxu0 %v761
        %930 = vmatpush.bf16.msra.mxu0 %v755
        %931 = vmatpush.bf16.msra.mxu0 %v749
        %932 = vmatpush.bf16.msra.mxu0 %v743
        %933 = vmatmul.bf16.gmra.mxu0 %v295
        %v934 = vpop.f32.mrf.mxu0
        %v935 = vadd.f32 %v922, %v934
        %v936 = vpop.f32.mrf.mxu0
        %937 = vdwg.mxu0
        %938 = vmatpush.bf16.msra.mxu0 %v738
        %939 = vmatpush.bf16.msra.mxu0 %v732
        %940 = vmatpush.bf16.msra.mxu0 %v726
        %941 = vmatpush.bf16.msra.mxu0 %v720
        %942 = vmatpush.bf16.msra.mxu0 %v714
        %943 = vmatpush.bf16.msra.mxu0 %v708
        %944 = vmatpush.bf16.msra.mxu0 %v702
        %945 = vmatpush.bf16.msra.mxu0 %v696
        %946 = vmatmul.bf16.gmra.mxu0 %v294
        %v947 = vpop.f32.mrf.mxu0
        %v948 = vadd.f32 %v396, %v947
        %v949 = vpop.f32.mrf.mxu0
        %950 = vdwg.mxu0
        %951 = vmatpush.bf16.msra.mxu0 %v786
        %952 = vmatpush.bf16.msra.mxu0 %v780
        %953 = vmatpush.bf16.msra.mxu0 %v774
        %954 = vmatpush.bf16.msra.mxu0 %v768
        %955 = vmatpush.bf16.msra.mxu0 %v762
        %956 = vmatpush.bf16.msra.mxu0 %v756
        %957 = vmatpush.bf16.msra.mxu0 %v750
        %958 = vmatpush.bf16.msra.mxu0 %v744
        %959 = vmatmul.bf16.gmra.mxu0 %v295
        %v960 = vpop.f32.mrf.mxu0
        %v961 = vadd.f32 %v948, %v960
        %v962 = vpop.f32.mrf.mxu0
        %963 = vdwg.mxu0
        %964 = vmatpush.bf16.msra.mxu0 %v739
        %965 = vmatpush.bf16.msra.mxu0 %v733
        %966 = vmatpush.bf16.msra.mxu0 %v727
        %967 = vmatpush.bf16.msra.mxu0 %v721
        %968 = vmatpush.bf16.msra.mxu0 %v715
        %969 = vmatpush.bf16.msra.mxu0 %v709
        %970 = vmatpush.bf16.msra.mxu0 %v703
        %971 = vmatpush.bf16.msra.mxu0 %v697
        %972 = vmatmul.bf16.gmra.mxu0 %v294
        %v973 = vpop.f32.mrf.mxu0
        %v974 = vadd.f32 %v397, %v973
        %v975 = vpop.f32.mrf.mxu0
        %976 = vdwg.mxu0
        %977 = vmatpush.bf16.msra.mxu0 %v787
        %978 = vmatpush.bf16.msra.mxu0 %v781
        %979 = vmatpush.bf16.msra.mxu0 %v775
        %980 = vmatpush.bf16.msra.mxu0 %v769
        %981 = vmatpush.bf16.msra.mxu0 %v763
        %982 = vmatpush.bf16.msra.mxu0 %v757
        %983 = vmatpush.bf16.msra.mxu0 %v751
        %984 = vmatpush.bf16.msra.mxu0 %v745
        %985 = vmatmul.bf16.gmra.mxu0 %v295
        %v986 = vpop.f32.mrf.mxu0
        %v987 = vadd.f32 %v974, %v986
        %v988 = vpop.f32.mrf.mxu0
        %989 = vdwg.mxu0
        %990 = vmatpush.bf16.msra.mxu0 %v740
        %991 = vmatpush.bf16.msra.mxu0 %v734
        %992 = vmatpush.bf16.msra.mxu0 %v728
        %993 = vmatpush.bf16.msra.mxu0 %v722
        %994 = vmatpush.bf16.msra.mxu0 %v716
        %995 = vmatpush.bf16.msra.mxu0 %v710
        %996 = vmatpush.bf16.msra.mxu0 %v704
        %997 = vmatpush.bf16.msra.mxu0 %v698
        %998 = vmatmul.bf16.gmra.mxu0 %v294
        %v999 = vpop.f32.mrf.mxu0
        %v1000 = vadd.f32 %v398, %v999
        %v1001 = vpop.f32.mrf.mxu0
        %1002 = vdwg.mxu0
        %1003 = vmatpush.bf16.msra.mxu0 %v788
        %1004 = vmatpush.bf16.msra.mxu0 %v782
        %1005 = vmatpush.bf16.msra.mxu0 %v776
        %1006 = vmatpush.bf16.msra.mxu0 %v770
        %1007 = vmatpush.bf16.msra.mxu0 %v764
        %1008 = vmatpush.bf16.msra.mxu0 %v758
        %1009 = vmatpush.bf16.msra.mxu0 %v752
        %1010 = vmatpush.bf16.msra.mxu0 %v746
        %1011 = vmatmul.bf16.gmra.mxu0 %v295
        %v1012 = vpop.f32.mrf.mxu0
        %v1013 = vadd.f32 %v1000, %v1012
        %v1014 = vpop.f32.mrf.mxu0
        %1015 = vdwg.mxu0
        %1016 = vmatpush.bf16.msra.mxu0 %v741
        %1017 = vmatpush.bf16.msra.mxu0 %v735
        %1018 = vmatpush.bf16.msra.mxu0 %v729
        %1019 = vmatpush.bf16.msra.mxu0 %v723
        %1020 = vmatpush.bf16.msra.mxu0 %v717
        %1021 = vmatpush.bf16.msra.mxu0 %v711
        %1022 = vmatpush.bf16.msra.mxu0 %v705
        %1023 = vmatpush.bf16.msra.mxu0 %v699
        %1024 = vmatmul.bf16.gmra.mxu0 %v294
        %v1025 = vpop.f32.mrf.mxu0
        %v1026 = vadd.f32 %v399, %v1025
        %v1027 = vpop.f32.mrf.mxu0
        %1028 = vdwg.mxu0
        %1029 = vmatpush.bf16.msra.mxu0 %v789
        %1030 = vmatpush.bf16.msra.mxu0 %v783
        %1031 = vmatpush.bf16.msra.mxu0 %v777
        %1032 = vmatpush.bf16.msra.mxu0 %v771
        %1033 = vmatpush.bf16.msra.mxu0 %v765
        %1034 = vmatpush.bf16.msra.mxu0 %v759
        %1035 = vmatpush.bf16.msra.mxu0 %v753
        %1036 = vmatpush.bf16.msra.mxu0 %v747
        %1037 = vmatmul.bf16.gmra.mxu0 %v295
        %v1038 = vpop.f32.mrf.mxu0
        %v1039 = vadd.f32 %v1026, %v1038
        %v1040 = vpop.f32.mrf.mxu0
        %1041 = vdwg.mxu0
        %v1042 = vpack.c.bf16 %v935, %v909
        %1043 = vst [vmem:[%s277] sm:$0xff] %v1042
        %v1044 = vpack.c.bf16 %v987, %v961
        %1045 = vst [vmem:[%s284] sm:$0xff] %v1044
        %v1046 = vpack.c.bf16 %v1039, %v1013
        %1047 = vst [vmem:[%s291] sm:$0xff] %v1046
        %s1048 = sand.u32 %s103, 1
        %s1049 = scalar_lea.sflag [#allocation4], %s1048
        %s1050 = sand.u32 %s103, 1
        %s1051 = smul.addr %s1050, 8
        %s1052 = scalar_lea.vmem [#allocation8], %s1051
        %s1053 = sand.u32 %s27, 1
        %s1054 = scalar_lea.sflag [#allocation10], %s1053
        %s1055 = sand.u32 %s129, 1
        %s1056 = smul.addr %s1055, 8
        %s1057 = scalar_lea.vmem [#allocation9], %s1056
        %s1058 = sand.u32 %s27, 1
        %s1059 = scalar_lea.sflag [#allocation10], %s1058
        %s1060 = sand.u32 %s155, 1
        %s1061 = smul.addr %s1060, 8
        %s1062 = scalar_lea.vmem [#allocation11], %s1061
        // Predicated region
        $region45: #{tpu_custom_call.1} parent=31 // pred_check
          %p1063 = pneg %p113
        $region46: #{tpu_custom_call.1} parent=31 // pred_check_branch
          %1065 = sbr.rel (%p1063) target = $region48
        $region47: #{tpu_custom_call.1} parent=31 // pred_region
          %1067 = vsyncadd %s1049, 0
          %s1068 = smul.addr %s27, 2
          %s1069 = smul.addr %s1068, 4
          %s1070 = scalar_lea.hbm %s3, %s1069
          %s1072 = sshll.u32 %s1052, 4
          %s1073 = int_to_ptr.vmem [resolvable:$true] %s1072
          %s1074 = sshll.u32 %s1070, 4
          %s1075 = int_to_ptr.hbm [resolvable:$true] %s1074
          %1077 = dma.vmem_to_hbm [thread:$0]  %s1073, 128, %s1075, %s1049
        $region48: #{tpu_custom_call.1} parent=31 // pred_fallthru
          _
        // Predicated region
        $region49: #{tpu_custom_call.1} parent=31 // pred_check
          %p1078 = pneg %p139
        $region50: #{tpu_custom_call.1} parent=31 // pred_check_branch
          %1080 = sbr.rel (%p1078) target = $region52
        $region51: #{tpu_custom_call.1} parent=31 // pred_region
          %1082 = vsyncadd %s1054, 0
          %s1083 = smul.addr %s27, 2
          %s1084 = smul.addr %s1083, 4
          %s1085 = scalar_lea.hbm %s4, %s1084
          %s1087 = sshll.u32 %s1057, 4
          %s1088 = int_to_ptr.vmem [resolvable:$true] %s1087
          %s1089 = sshll.u32 %s1085, 4
          %s1090 = int_to_ptr.hbm [resolvable:$true] %s1089
          %1092 = dma.vmem_to_hbm [thread:$0]  %s1088, 128, %s1090, %s1054
        $region52: #{tpu_custom_call.1} parent=31 // pred_fallthru
          _
        // Predicated region
        $region53: #{tpu_custom_call.1} parent=31 // pred_check
          %p1093 = pneg %p165
        $region54: #{tpu_custom_call.1} parent=31 // pred_check_branch
          %1095 = sbr.rel (%p1093) target = $region56
        $region55: #{tpu_custom_call.1} parent=31 // pred_region
          %1097 = vsyncadd %s1059, 0
          %s1098 = smul.addr %s27, 2
          %s1099 = smul.addr %s1098, 4
          %s1100 = scalar_lea.hbm %s5, %s1099
          %s1102 = sshll.u32 %s1062, 4
          %s1103 = int_to_ptr.vmem [resolvable:$true] %s1102
          %s1104 = sshll.u32 %s1100, 4
          %s1105 = int_to_ptr.hbm [resolvable:$true] %s1104
          %1107 = dma.vmem_to_hbm [thread:$0]  %s1103, 128, %s1105, %s1059
        $region56: #{tpu_custom_call.1} parent=31 // pred_fallthru
          _
      $region32: #{tpu_custom_call.1} parent=5 // pred_fallthru
        _
      %p1108 = scmp.le.s32.totalorder 2, %s22
      // Predicated region
      $region57: #{tpu_custom_call.1} parent=5 // pred_check
        %p1109 = pneg %p1108
      $region58: #{tpu_custom_call.1} parent=5 // pred_check_branch
        %1111 = sbr.rel (%p1109) target = $region60
      $region59: #{tpu_custom_call.1} parent=5 // pred_region
        %s1112 = ssub.s32 %s22, 2
        // Predicated region
        $region61: #{tpu_custom_call.1} parent=59 // pred_check
          %p1113 = pneg %p119
        $region62: #{tpu_custom_call.1} parent=59 // pred_check_branch
          %1115 = sbr.rel (%p1113) target = $region64
        $region63: #{tpu_custom_call.1} parent=59 // pred_region
          %s1116 = sand.u32 %s104, 1
          %s1117 = scalar_lea.sflag [#allocation4], %s1116
          %s1118 = sand.u32 %s104, 1
          %s1119 = smul.addr %s1118, 8
          %s1120 = scalar_lea.vmem [#allocation8], %s1119
          %1122 = dma.done %s1117, 128
        $region64: #{tpu_custom_call.1} parent=59 // pred_fallthru
          _
        // Predicated region
        $region65: #{tpu_custom_call.1} parent=59 // pred_check
          %p1123 = pneg %p145
        $region66: #{tpu_custom_call.1} parent=59 // pred_check_branch
          %1125 = sbr.rel (%p1123) target = $region68
        $region67: #{tpu_custom_call.1} parent=59 // pred_region
          %s1126 = sand.u32 %s28, 1
          %s1127 = scalar_lea.sflag [#allocation10], %s1126
          %s1128 = sand.u32 %s130, 1
          %s1129 = smul.addr %s1128, 8
          %s1130 = scalar_lea.vmem [#allocation9], %s1129
          %1132 = dma.done %s1127, 128
        $region68: #{tpu_custom_call.1} parent=59 // pred_fallthru
          _
        // Predicated region
        $region69: #{tpu_custom_call.1} parent=59 // pred_check
          %p1133 = pneg %p171
        $region70: #{tpu_custom_call.1} parent=59 // pred_check_branch
          %1135 = sbr.rel (%p1133) target = $region72
        $region71: #{tpu_custom_call.1} parent=59 // pred_region
          %s1136 = sand.u32 %s28, 1
          %s1137 = scalar_lea.sflag [#allocation10], %s1136
          %s1138 = sand.u32 %s156, 1
          %s1139 = smul.addr %s1138, 8
          %s1140 = scalar_lea.vmem [#allocation11], %s1139
          %1142 = dma.done %s1137, 128
        $region72: #{tpu_custom_call.1} parent=59 // pred_fallthru
          _
      $region60: #{tpu_custom_call.1} parent=5 // pred_fallthru
        _
    $region6: #{tpu_custom_call.1} parent=1 // loop_footer
      %s26 = sadd.s32 1, %s22
    $region7: #{tpu_custom_call.1} parent=1 // loop_footer_branch
      %21 = sbr.rel target = $region3
    $region8: #{tpu_custom_call.1} parent=1 // loop_exit
      _
    %1143 = vsyncpa [#allocation3], 1
    %s1144 = scalar_lea.sflag [#allocation3], 1
    %1145 = vsyncpa %s1144, 1
    %1146 = vsyncpa [#allocation6], 1
    %1147 = vsyncpa [#allocation4], 1
    %s1148 = scalar_lea.sflag [#allocation4], 1
    %1149 = vsyncpa %s1148, 1
    %1150 = vsyncpa [#allocation10], 1
    %s1151 = scalar_lea.sflag [#allocation10], 1
    %1152 = vsyncpa %s1151, 1

</llo_original>
